<compile_context>
chip_gen: v6e
topology: v6e:2x2x1
jax: 0.10.0
libtpu: 0.0.40
codegen_flags: <defaults>
</compile_context>

<pallas_src>
import functools

import jax
import jax.numpy as jnp
from jax import lax
from jax.experimental import pallas as pl
from jax.experimental.pallas import tpu as pltpu

BN_EPS = 1e-5
NEG_SLOPE = 0.01


def _bn_leaky(y, gamma, beta):
  """BatchNorm1d (training-mode batch stats, biased var) -> LeakyReLU(0.01).

  One-pass statistics: var = E[y^2] - E[y]^2 (clamped at 0). Values are
  post-Linear O(1) so f32 cancellation is not a concern.
  """
  mean = jnp.mean(y, axis=0, keepdims=True)                      # (1, out)
  mean_sq = jnp.mean(y * y, axis=0, keepdims=True)               # (1, out)
  var = jnp.maximum(mean_sq - mean * mean, 0.0)
  y = (y - mean) * lax.rsqrt(var + BN_EPS) * gamma + beta
  return jnp.where(y >= 0.0, y, NEG_SLOPE * y)


def feature_aggregator_kernel(
    img_ref,        # (N, 3*h*w)  f32
    bbox_ref,       # (N, 4)      f32
    w_img_ref,      # (3*h*w, D)  bf16  -- fused encoder + img_head weight
    w_agg_ref,      # (D, 2D)     bf16
    w_fin_ref,      # (2D, D)     bf16
    vec_ref,        # (14, 2D)    f32   -- packed small params (see layout)
    out_ref,        # (N, D)      f32
):
  D = out_ref.shape[1]

  # ---- unpack the small-parameter slab (all static slices, zero-cost views)
  # rows 0-3 : bbox_head Linear weight (4, D), zero-padded to width 2D
  # row  4   : fused img bias       row 5 : img BN gamma   row 6 : img BN beta
  # row  7   : bbox bias            row 8 : bbox BN gamma  row 9 : bbox BN beta
  # row 10   : agg bias (2D)        row 11: agg BN gamma   row 12: agg BN beta
  # row 13   : final_layer bias
  w_bbox = vec_ref[0:4, 0:D]
  b_img, g_img, be_img = vec_ref[4:5, 0:D], vec_ref[5:6, 0:D], vec_ref[6:7, 0:D]
  b_bbox, g_bbox, be_bbox = vec_ref[7:8, 0:D], vec_ref[8:9, 0:D], vec_ref[9:10, 0:D]
  b_agg, g_agg, be_agg = vec_ref[10:11, :], vec_ref[11:12, :], vec_ref[12:13, :]
  b_fin = vec_ref[13:14, 0:D]

  # ---- img branch: (encoder ∘ img_head Linear) fused into one bf16 matmul
  # TODO(synk): img_encoder is an injected external module in the PyTorch code;
  # here it is a deterministic linear stand-in, which is why it can be folded
  # into img_head. A real CNN encoder would break this fusion.
  x_img = img_ref[...].astype(jnp.bfloat16)
  y_img = jnp.dot(x_img, w_img_ref[...],
                  preferred_element_type=jnp.float32) + b_img          # (N, D)
  img_feat = _bn_leaky(y_img, g_img, be_img)

  # ---- bbox branch (tiny 4xD matmul, kept in f32)
  y_bbox = jnp.dot(bbox_ref[...], w_bbox,
                   preferred_element_type=jnp.float32) + b_bbox        # (N, D)
  bbox_feat = _bn_leaky(y_bbox, g_bbox, be_bbox)

  # ---- residual add -> agg head -> final layer
  feat = img_feat + bbox_feat                                          # (N, D)
  y_agg = jnp.dot(feat.astype(jnp.bfloat16), w_agg_ref[...],
                  preferred_element_type=jnp.float32) + b_agg          # (N, 2D)
  feat = _bn_leaky(y_agg, g_agg, be_agg)

  out_ref[...] = (jnp.dot(feat.astype(jnp.bfloat16), w_fin_ref[...],
                          preferred_element_type=jnp.float32)
                  + b_fin)                                             # (N, D)


def make_params(key, img_flat_dim, feat_dim):
  """Deterministic synthetic parameters (shapes match the PyTorch module)."""
  def linear(k, din, dout):
    k1, k2 = jax.random.split(k)
    bound = 1.0 / jnp.sqrt(din)
    w = jax.random.uniform(k1, (din, dout), jnp.float32, -bound, bound)
    b = jax.random.uniform(k2, (1, dout), jnp.float32, -bound, bound)
    return w, b

  def bn(k, d):
    k1, k2 = jax.random.split(k)
    gamma = 1.0 + 0.1 * jax.random.normal(k1, (1, d), jnp.float32)
    beta = 0.1 * jax.random.normal(k2, (1, d), jnp.float32)
    return gamma, beta

  ks = jax.random.split(key, 8)
  w_enc, b_enc = linear(ks[0], img_flat_dim, 1000)        # stand-in encoder
  w_img, b_img = linear(ks[1], 1000, feat_dim)            # img_head Linear
  g_img, be_img = bn(ks[2], feat_dim)                     # img_head BN
  w_bbox, b_bbox = linear(ks[3], 4, feat_dim)             # bbox_head Linear
  g_bbox, be_bbox = bn(ks[4], feat_dim)                   # bbox_head BN
  w_agg, b_agg = linear(ks[5], feat_dim, feat_dim * 2)    # agg_head Linear
  g_agg, be_agg = bn(ks[6], feat_dim * 2)                 # agg_head BN
  w_fin, b_fin = linear(ks[7], feat_dim * 2, feat_dim)    # final_layer
  return (w_enc, b_enc,
          w_img, b_img, g_img, be_img,
          w_bbox, b_bbox, g_bbox, be_bbox,
          w_agg, b_agg, g_agg, be_agg,
          w_fin, b_fin)


def pack_params(params, feat_dim):
  """Fuse encoder->img_head, cast big weights to bf16, pack small vectors."""
  (w_enc, b_enc,
   w_img, b_img, g_img, be_img,
   w_bbox, b_bbox, g_bbox, be_bbox,
   w_agg, b_agg, g_agg, be_agg,
   w_fin, b_fin) = params

  # Fold the (linear) encoder into img_head: no nonlinearity between them.
  w_img_fused = (w_enc @ w_img).astype(jnp.bfloat16)           # (3hw, D)
  b_img_fused = b_enc @ w_img + b_img                          # (1, D)

  d2 = 2 * feat_dim

  def pad_w(v):   # (r, feat_dim) -> (r, 2*feat_dim), zero-padded lanes
    return jnp.pad(v, ((0, 0), (0, d2 - v.shape[1])))

  vec_slab = jnp.concatenate(
      [pad_w(w_bbox),                                          # rows 0-3
       pad_w(b_img_fused), pad_w(g_img), pad_w(be_img),        # rows 4-6
       pad_w(b_bbox), pad_w(g_bbox), pad_w(be_bbox),           # rows 7-9
       b_agg, g_agg, be_agg,                                   # rows 10-12
       pad_w(b_fin)],                                          # row 13
      axis=0).astype(jnp.float32)                              # (14, 2D)

  return (w_img_fused,
          w_agg.astype(jnp.bfloat16),
          w_fin.astype(jnp.bfloat16),
          vec_slab)


@functools.partial(jax.jit, static_argnames=("feat_dim",))
def feature_aggregator(img, bbox, packed, *, feat_dim):
  """img: (bs, 3, h, w) NCHW float32; bbox: (bs, 4) float32."""
  bs = img.shape[0]
  img_flat = img.reshape(bs, -1)            # flatten NCHW row-major (torch .view)
  w_img_fused, w_agg, w_fin, vec_slab = packed

  vmem = pl.BlockSpec(memory_space=pltpu.MemorySpace.VMEM)
  return pl.pallas_call(
      feature_aggregator_kernel,
      out_shape=jax.ShapeDtypeStruct((bs, feat_dim), jnp.float32),
      in_specs=[vmem] * 6,
      out_specs=vmem,
  )(img_flat, bbox, w_img_fused, w_agg, w_fin, vec_slab)


def _reference(img, bbox, packed, feat_dim):
  """Pure-JAX reference using the same (fused, bf16) parameters."""
  w_img_fused, w_agg, w_fin, vec = packed
  d = feat_dim
  w_bbox = vec[0:4, 0:d]
  b_img, g_img, be_img = vec[4:5, 0:d], vec[5:6, 0:d], vec[6:7, 0:d]
  b_bbox, g_bbox, be_bbox = vec[7:8, 0:d], vec[8:9, 0:d], vec[9:10, 0:d]
  b_agg, g_agg, be_agg = vec[10:11, :], vec[11:12, :], vec[12:13, :]
  b_fin = vec[13:14, 0:d]

  def bn_leaky(y, g, b):
    mean = jnp.mean(y, axis=0, keepdims=True)
    var = jnp.mean((y - mean) ** 2, axis=0, keepdims=True)
    y = (y - mean) * lax.rsqrt(var + BN_EPS) * g + b
    return jnp.where(y >= 0.0, y, NEG_SLOPE * y)

  x = img.reshape(img.shape[0], -1)
  y_img = jnp.dot(x.astype(jnp.bfloat16), w_img_fused,
                  preferred_element_type=jnp.float32) + b_img
  img_feat = bn_leaky(y_img, g_img, be_img)
  y_bbox = jnp.dot(bbox, w_bbox, preferred_element_type=jnp.float32) + b_bbox
  bbox_feat = bn_leaky(y_bbox, g_bbox, be_bbox)
  feat = img_feat + bbox_feat
  feat = bn_leaky(jnp.dot(feat.astype(jnp.bfloat16), w_agg,
                          preferred_element_type=jnp.float32) + b_agg,
                  g_agg, be_agg)
  return (jnp.dot(feat.astype(jnp.bfloat16), w_fin,
                  preferred_element_type=jnp.float32) + b_fin)


if __name__ == "__main__":
  bs, h, w = 2, 16, 16          # NOTE: for real throughput, batch to N >= 128
  feat_dim = 128

  key = jax.random.PRNGKey(0)
  k_img, k_bbox, k_par = jax.random.split(key, 3)

  img = jax.random.normal(k_img, (bs, 3, h, w), jnp.float32)     # NCHW
  bbox = jax.random.uniform(k_bbox, (bs, 4), jnp.float32)        # (bs, 4)
  params = make_params(k_par, 3 * h * w, feat_dim)
  packed = pack_params(params, feat_dim)

  out = feature_aggregator(img, bbox, packed, feat_dim=feat_dim)
  out = jax.block_until_ready(out)

  assert out.shape == (bs, feat_dim) and out.dtype == jnp.float32
  assert bool(jnp.all(jnp.isfinite(out)))
  ref = _reference(img, bbox, packed, feat_dim)
  assert bool(jnp.allclose(out, ref, rtol=1e-2, atol=1e-2))
  print("KERNEL_OK")
</pallas_src>

<mosaic_0001>
module attributes {stable_mosaic.version = 11 : i64} {
  func.func @feature_aggregator_kernel(%arg0: memref<2x768xf32, #tpu.memory_space<vmem>>, %arg1: memref<2x4xf32, #tpu.memory_space<vmem>>, %arg2: memref<768x128xbf16, #tpu.memory_space<vmem>>, %arg3: memref<128x256xbf16, #tpu.memory_space<vmem>>, %arg4: memref<256x128xbf16, #tpu.memory_space<vmem>>, %arg5: memref<14x256xf32, #tpu.memory_space<vmem>>, %arg6: memref<2x128xf32, #tpu.memory_space<vmem>>) attributes {dimension_semantics = [], scalar_prefetch = 0 : i64, scratch_operands = 0 : i64, tpu.core_type = #tpu.core_type<tc>} {
    %c0 = arith.constant 0 : index
    %c0_0 = arith.constant 0 : index
    %0 = vector.load %arg5[%c0, %c0_0] : memref<14x256xf32, #tpu.memory_space<vmem>>, vector<4x128xf32>
    %c4 = arith.constant 4 : index
    %c0_1 = arith.constant 0 : index
    %1 = vector.load %arg5[%c4, %c0_1] : memref<14x256xf32, #tpu.memory_space<vmem>>, vector<1x128xf32>
    %c5 = arith.constant 5 : index
    %c0_2 = arith.constant 0 : index
    %2 = vector.load %arg5[%c5, %c0_2] : memref<14x256xf32, #tpu.memory_space<vmem>>, vector<1x128xf32>
    %c6 = arith.constant 6 : index
    %c0_3 = arith.constant 0 : index
    %3 = vector.load %arg5[%c6, %c0_3] : memref<14x256xf32, #tpu.memory_space<vmem>>, vector<1x128xf32>
    %c7 = arith.constant 7 : index
    %c0_4 = arith.constant 0 : index
    %4 = vector.load %arg5[%c7, %c0_4] : memref<14x256xf32, #tpu.memory_space<vmem>>, vector<1x128xf32>
    %c8 = arith.constant 8 : index
    %c0_5 = arith.constant 0 : index
    %5 = vector.load %arg5[%c8, %c0_5] : memref<14x256xf32, #tpu.memory_space<vmem>>, vector<1x128xf32>
    %c9 = arith.constant 9 : index
    %c0_6 = arith.constant 0 : index
    %6 = vector.load %arg5[%c9, %c0_6] : memref<14x256xf32, #tpu.memory_space<vmem>>, vector<1x128xf32>
    %c10 = arith.constant 10 : index
    %c0_7 = arith.constant 0 : index
    %7 = vector.load %arg5[%c10, %c0_7] : memref<14x256xf32, #tpu.memory_space<vmem>>, vector<1x256xf32>
    %c11 = arith.constant 11 : index
    %c0_8 = arith.constant 0 : index
    %8 = vector.load %arg5[%c11, %c0_8] : memref<14x256xf32, #tpu.memory_space<vmem>>, vector<1x256xf32>
    %c12 = arith.constant 12 : index
    %c0_9 = arith.constant 0 : index
    %9 = vector.load %arg5[%c12, %c0_9] : memref<14x256xf32, #tpu.memory_space<vmem>>, vector<1x256xf32>
    %c13 = arith.constant 13 : index
    %c0_10 = arith.constant 0 : index
    %10 = vector.load %arg5[%c13, %c0_10] : memref<14x256xf32, #tpu.memory_space<vmem>>, vector<1x128xf32>
    %c0_11 = arith.constant 0 : index
    %c0_12 = arith.constant 0 : index
    %11 = vector.load %arg0[%c0_11, %c0_12] : memref<2x768xf32, #tpu.memory_space<vmem>>, vector<2x768xf32>
    %12 = arith.truncf %11 : vector<2x768xf32> to vector<2x768xbf16>
    %c0_13 = arith.constant 0 : index
    %c0_14 = arith.constant 0 : index
    %13 = vector.load %arg2[%c0_13, %c0_14] : memref<768x128xbf16, #tpu.memory_space<vmem>>, vector<768x128xbf16>
    %cst = arith.constant dense<0.000000e+00> : vector<2x128xf32>
    %14 = tpu.matmul %12, %13, %cst {dimension_numbers = #tpu.dot_dimension_numbers<[1], [0], [0], [1], [0, 0, 1, 1], [], []>} : vector<2x768xbf16>, vector<768x128xbf16>, vector<2x128xf32> -> vector<2x128xf32>
    %15 = vector.broadcast %1 : vector<1x128xf32> to vector<2x128xf32>
    %16 = arith.addf %14, %15 : vector<2x128xf32>
    %cst_15 = arith.constant dense<0.000000e+00> : vector<128xf32>
    %17 = vector.multi_reduction <add>, %16, %cst_15 [0] : vector<2x128xf32> to vector<128xf32>
    %18 = vector.shape_cast %17 : vector<128xf32> to vector<1x128xf32>
    %cst_16 = arith.constant 2.000000e+00 : f32
    %19 = vector.broadcast %cst_16 : f32 to vector<1x128xf32>
    %20 = arith.divf %18, %19 : vector<1x128xf32>
    %21 = arith.mulf %16, %16 : vector<2x128xf32>
    %cst_17 = arith.constant dense<0.000000e+00> : vector<128xf32>
    %22 = vector.multi_reduction <add>, %21, %cst_17 [0] : vector<2x128xf32> to vector<128xf32>
    %23 = vector.shape_cast %22 : vector<128xf32> to vector<1x128xf32>
    %cst_18 = arith.constant 2.000000e+00 : f32
    %24 = vector.broadcast %cst_18 : f32 to vector<1x128xf32>
    %25 = arith.divf %23, %24 : vector<1x128xf32>
    %26 = arith.mulf %20, %20 : vector<1x128xf32>
    %27 = arith.subf %25, %26 : vector<1x128xf32>
    %cst_19 = arith.constant 0.000000e+00 : f32
    %28 = vector.broadcast %cst_19 : f32 to vector<1x128xf32>
    %29 = arith.maximumf %27, %28 : vector<1x128xf32>
    %30 = vector.broadcast %20 : vector<1x128xf32> to vector<2x128xf32>
    %31 = arith.subf %16, %30 : vector<2x128xf32>
    %cst_20 = arith.constant 9.99999974E-6 : f32
    %32 = vector.broadcast %cst_20 : f32 to vector<1x128xf32>
    %33 = arith.addf %29, %32 : vector<1x128xf32>
    %34 = math.rsqrt %33 : vector<1x128xf32>
    %35 = vector.broadcast %34 : vector<1x128xf32> to vector<2x128xf32>
    %36 = arith.mulf %31, %35 : vector<2x128xf32>
    %37 = vector.broadcast %2 : vector<1x128xf32> to vector<2x128xf32>
    %38 = arith.mulf %36, %37 : vector<2x128xf32>
    %39 = vector.broadcast %3 : vector<1x128xf32> to vector<2x128xf32>
    %40 = arith.addf %38, %39 : vector<2x128xf32>
    %cst_21 = arith.constant 0.000000e+00 : f32
    %41 = vector.broadcast %cst_21 : f32 to vector<2x128xf32>
    %42 = arith.cmpf oge, %40, %41 : vector<2x128xf32>
    %cst_22 = arith.constant 0.00999999977 : f32
    %43 = vector.broadcast %cst_22 : f32 to vector<2x128xf32>
    %44 = arith.mulf %43, %40 : vector<2x128xf32>
    %45 = arith.select %42, %40, %44 : vector<2x128xi1>, vector<2x128xf32>
    %c0_23 = arith.constant 0 : index
    %c0_24 = arith.constant 0 : index
    %46 = vector.load %arg1[%c0_23, %c0_24] : memref<2x4xf32, #tpu.memory_space<vmem>>, vector<2x4xf32>
    %cst_25 = arith.constant dense<0.000000e+00> : vector<2x128xf32>
    %47 = tpu.matmul %46, %0, %cst_25 {dimension_numbers = #tpu.dot_dimension_numbers<[1], [0], [0], [1], [0, 0, 1, 1], [], []>} : vector<2x4xf32>, vector<4x128xf32>, vector<2x128xf32> -> vector<2x128xf32>
    %48 = vector.broadcast %4 : vector<1x128xf32> to vector<2x128xf32>
    %49 = arith.addf %47, %48 : vector<2x128xf32>
    %cst_26 = arith.constant dense<0.000000e+00> : vector<128xf32>
    %50 = vector.multi_reduction <add>, %49, %cst_26 [0] : vector<2x128xf32> to vector<128xf32>
    %51 = vector.shape_cast %50 : vector<128xf32> to vector<1x128xf32>
    %cst_27 = arith.constant 2.000000e+00 : f32
    %52 = vector.broadcast %cst_27 : f32 to vector<1x128xf32>
    %53 = arith.divf %51, %52 : vector<1x128xf32>
    %54 = arith.mulf %49, %49 : vector<2x128xf32>
    %cst_28 = arith.constant dense<0.000000e+00> : vector<128xf32>
    %55 = vector.multi_reduction <add>, %54, %cst_28 [0] : vector<2x128xf32> to vector<128xf32>
    %56 = vector.shape_cast %55 : vector<128xf32> to vector<1x128xf32>
    %cst_29 = arith.constant 2.000000e+00 : f32
    %57 = vector.broadcast %cst_29 : f32 to vector<1x128xf32>
    %58 = arith.divf %56, %57 : vector<1x128xf32>
    %59 = arith.mulf %53, %53 : vector<1x128xf32>
    %60 = arith.subf %58, %59 : vector<1x128xf32>
    %cst_30 = arith.constant 0.000000e+00 : f32
    %61 = vector.broadcast %cst_30 : f32 to vector<1x128xf32>
    %62 = arith.maximumf %60, %61 : vector<1x128xf32>
    %63 = vector.broadcast %53 : vector<1x128xf32> to vector<2x128xf32>
    %64 = arith.subf %49, %63 : vector<2x128xf32>
    %cst_31 = arith.constant 9.99999974E-6 : f32
    %65 = vector.broadcast %cst_31 : f32 to vector<1x128xf32>
    %66 = arith.addf %62, %65 : vector<1x128xf32>
    %67 = math.rsqrt %66 : vector<1x128xf32>
    %68 = vector.broadcast %67 : vector<1x128xf32> to vector<2x128xf32>
    %69 = arith.mulf %64, %68 : vector<2x128xf32>
    %70 = vector.broadcast %5 : vector<1x128xf32> to vector<2x128xf32>
    %71 = arith.mulf %69, %70 : vector<2x128xf32>
    %72 = vector.broadcast %6 : vector<1x128xf32> to vector<2x128xf32>
    %73 = arith.addf %71, %72 : vector<2x128xf32>
    %cst_32 = arith.constant 0.000000e+00 : f32
    %74 = vector.broadcast %cst_32 : f32 to vector<2x128xf32>
    %75 = arith.cmpf oge, %73, %74 : vector<2x128xf32>
    %cst_33 = arith.constant 0.00999999977 : f32
    %76 = vector.broadcast %cst_33 : f32 to vector<2x128xf32>
    %77 = arith.mulf %76, %73 : vector<2x128xf32>
    %78 = arith.select %75, %73, %77 : vector<2x128xi1>, vector<2x128xf32>
    %79 = arith.addf %45, %78 : vector<2x128xf32>
    %80 = arith.truncf %79 : vector<2x128xf32> to vector<2x128xbf16>
    %c0_34 = arith.constant 0 : index
    %c0_35 = arith.constant 0 : index
    %81 = vector.load %arg3[%c0_34, %c0_35] : memref<128x256xbf16, #tpu.memory_space<vmem>>, vector<128x256xbf16>
    %cst_36 = arith.constant dense<0.000000e+00> : vector<2x256xf32>
    %82 = tpu.matmul %80, %81, %cst_36 {dimension_numbers = #tpu.dot_dimension_numbers<[1], [0], [0], [1], [0, 0, 1, 1], [], []>} : vector<2x128xbf16>, vector<128x256xbf16>, vector<2x256xf32> -> vector<2x256xf32>
    %83 = vector.broadcast %7 : vector<1x256xf32> to vector<2x256xf32>
    %84 = arith.addf %82, %83 : vector<2x256xf32>
    %cst_37 = arith.constant dense<0.000000e+00> : vector<256xf32>
    %85 = vector.multi_reduction <add>, %84, %cst_37 [0] : vector<2x256xf32> to vector<256xf32>
    %86 = vector.shape_cast %85 : vector<256xf32> to vector<1x256xf32>
    %cst_38 = arith.constant 2.000000e+00 : f32
    %87 = vector.broadcast %cst_38 : f32 to vector<1x256xf32>
    %88 = arith.divf %86, %87 : vector<1x256xf32>
    %89 = arith.mulf %84, %84 : vector<2x256xf32>
    %cst_39 = arith.constant dense<0.000000e+00> : vector<256xf32>
    %90 = vector.multi_reduction <add>, %89, %cst_39 [0] : vector<2x256xf32> to vector<256xf32>
    %91 = vector.shape_cast %90 : vector<256xf32> to vector<1x256xf32>
    %cst_40 = arith.constant 2.000000e+00 : f32
    %92 = vector.broadcast %cst_40 : f32 to vector<1x256xf32>
    %93 = arith.divf %91, %92 : vector<1x256xf32>
    %94 = arith.mulf %88, %88 : vector<1x256xf32>
    %95 = arith.subf %93, %94 : vector<1x256xf32>
    %cst_41 = arith.constant 0.000000e+00 : f32
    %96 = vector.broadcast %cst_41 : f32 to vector<1x256xf32>
    %97 = arith.maximumf %95, %96 : vector<1x256xf32>
    %98 = vector.broadcast %88 : vector<1x256xf32> to vector<2x256xf32>
    %99 = arith.subf %84, %98 : vector<2x256xf32>
    %cst_42 = arith.constant 9.99999974E-6 : f32
    %100 = vector.broadcast %cst_42 : f32 to vector<1x256xf32>
    %101 = arith.addf %97, %100 : vector<1x256xf32>
    %102 = math.rsqrt %101 : vector<1x256xf32>
    %103 = vector.broadcast %102 : vector<1x256xf32> to vector<2x256xf32>
    %104 = arith.mulf %99, %103 : vector<2x256xf32>
    %105 = vector.broadcast %8 : vector<1x256xf32> to vector<2x256xf32>
    %106 = arith.mulf %104, %105 : vector<2x256xf32>
    %107 = vector.broadcast %9 : vector<1x256xf32> to vector<2x256xf32>
    %108 = arith.addf %106, %107 : vector<2x256xf32>
    %cst_43 = arith.constant 0.000000e+00 : f32
    %109 = vector.broadcast %cst_43 : f32 to vector<2x256xf32>
    %110 = arith.cmpf oge, %108, %109 : vector<2x256xf32>
    %cst_44 = arith.constant 0.00999999977 : f32
    %111 = vector.broadcast %cst_44 : f32 to vector<2x256xf32>
    %112 = arith.mulf %111, %108 : vector<2x256xf32>
    %113 = arith.select %110, %108, %112 : vector<2x256xi1>, vector<2x256xf32>
    %114 = arith.truncf %113 : vector<2x256xf32> to vector<2x256xbf16>
    %c0_45 = arith.constant 0 : index
    %c0_46 = arith.constant 0 : index
    %115 = vector.load %arg4[%c0_45, %c0_46] : memref<256x128xbf16, #tpu.memory_space<vmem>>, vector<256x128xbf16>
    %cst_47 = arith.constant dense<0.000000e+00> : vector<2x128xf32>
    %116 = tpu.matmul %114, %115, %cst_47 {dimension_numbers = #tpu.dot_dimension_numbers<[1], [0], [0], [1], [0, 0, 1, 1], [], []>} : vector<2x256xbf16>, vector<256x128xbf16>, vector<2x128xf32> -> vector<2x128xf32>
    %117 = vector.broadcast %10 : vector<1x128xf32> to vector<2x128xf32>
    %118 = arith.addf %116, %117 : vector<2x128xf32>
    %c0_48 = arith.constant 0 : index
    %c0_49 = arith.constant 0 : index
    %119 = vector.load %arg6[%c0_48, %c0_49] : memref<2x128xf32, #tpu.memory_space<vmem>>, vector<2x128xf32>
    tpu.vector_store %arg6[%c0_48, %c0_49], %118 {strides = array<i32>} : memref<2x128xf32, #tpu.memory_space<vmem>>, vector<2x128xf32>,
    return
  }
}

</mosaic_0001>

<llo_original>
// kernel: feature_aggregator.1
$region0: #{feature_aggregator.1}
  #allocation0 [shape = 'u32[]', space=smem, size = 0x4, offset = 0x4, fixed_abs, tag = 'smem constant byte address 0x4 - core index']
  #allocation1 [shape = 'u32[144,128]{1,0:T(1,128)}', space=vmem, size = 0x12000, scoped, tag = 'internal scratch']
  %s0 = inlined_call_operand.vmem [shape: f32[2,768], index: 0, kind: input, shape index: {}]
  %s1 = inlined_call_operand.vmem [shape: f32[2,4], index: 1, kind: input, shape index: {}]
  %s2 = inlined_call_operand.hbm [shape: bf16[768,128], index: 2, kind: input, shape index: {}]
  %s3 = inlined_call_operand.hbm [shape: bf16[128,256], index: 3, kind: input, shape index: {}]
  %s4 = inlined_call_operand.hbm [shape: bf16[256,128], index: 4, kind: input, shape index: {}]
  %s5 = inlined_call_operand.vmem [shape: f32[14,256], index: 5, kind: input, shape index: {}]
  %s6 = inlined_call_operand.hbm [shape: f32[2,128], index: 6, kind: output, shape index: {}]
  %s7 = sld [smem:[#allocation0]]
  $region46: #{feature_aggregator.1} parent=0
    _
  %s9 = ssub.s32 1, %s7
  %s10 = scalar_select 0, %s9, %s7
  $region1: #{feature_aggregator.1} parent=0
    #allocation2 [shape = 'u8[196608]{0}', space=vmem, size = 0x30000, scoped, tag = 'input window, operand 2, single buffered']
    #allocation3 [shape = 's32[1]{0}', space=sflag, size = 0x4, scoped, tag = 'scoped memory for feature_aggregator.1']
    #allocation4 [shape = 's32[1]{0}', space=sflag, size = 0x4, scoped, tag = 'scoped memory for feature_aggregator.1']
    #allocation5 [shape = 'u8[65536]{0}', space=vmem, size = 0x10000, scoped, tag = 'input window, operand 3, single buffered']
    #allocation6 [shape = 's32[1]{0}', space=sflag, size = 0x4, scoped, tag = 'scoped memory for feature_aggregator.1']
    #allocation7 [shape = 'u8[65536]{0}', space=vmem, size = 0x10000, scoped, tag = 'input window, operand 4, single buffered']
    #allocation8 [shape = 'u8[1024]{0}', space=vmem, size = 0x400, scoped, tag = 'output window, operand 0, single buffered']
    %11 = vsyncpa [#allocation3], 0
    %12 = vsyncpa [#allocation6], 0
    %13 = vsyncpa [#allocation4], 0
    // Predicated region
    $region2: #{feature_aggregator.1} parent=1 // pred_check
      _
    $region3: #{feature_aggregator.1} parent=1 // pred_check_branch
      %15 = sbr.rel (0) target = $region5
    $region4: #{feature_aggregator.1} parent=1 // pred_region
      _
    $region5: #{feature_aggregator.1} parent=1 // pred_fallthru
      _
    // Predicated region
    $region6: #{feature_aggregator.1} parent=1 // pred_check
      _
    $region7: #{feature_aggregator.1} parent=1 // pred_check_branch
      %17 = sbr.rel (0) target = $region9
    $region8: #{feature_aggregator.1} parent=1 // pred_region
      _
    $region9: #{feature_aggregator.1} parent=1 // pred_fallthru
      _
    // Predicated region
    $region10: #{feature_aggregator.1} parent=1 // pred_check
      _
    $region11: #{feature_aggregator.1} parent=1 // pred_check_branch
      %19 = sbr.rel (0) target = $region13
    $region12: #{feature_aggregator.1} parent=1 // pred_region
      %s21 = ssub.s32 6144, 6144
      %22 = vsyncadd [#allocation3], %s21
      %s23 = sshll.u32 [#allocation2], 4
      %s24 = int_to_ptr.vmem [resolvable:$true] %s23
      %29 = dma.hbm_to_vmem [thread:$0]  %s2, 6144, %s24, [#allocation3], 64, 64, 4
    $region13: #{feature_aggregator.1} parent=1 // pred_fallthru
      _
    // Predicated region
    $region14: #{feature_aggregator.1} parent=1 // pred_check
      _
    $region15: #{feature_aggregator.1} parent=1 // pred_check_branch
      %31 = sbr.rel (0) target = $region17
    $region16: #{feature_aggregator.1} parent=1 // pred_region
      %s33 = ssub.s32 2048, 2048
      %34 = vsyncadd [#allocation6], %s33
      %s35 = sshll.u32 [#allocation5], 4
      %s36 = int_to_ptr.vmem [resolvable:$true] %s35
      %41 = dma.hbm_to_vmem [thread:$0]  %s3, 2048, %s36, [#allocation6], 128, 128, 8
    $region17: #{feature_aggregator.1} parent=1 // pred_fallthru
      _
    // Predicated region
    $region18: #{feature_aggregator.1} parent=1 // pred_check
      _
    $region19: #{feature_aggregator.1} parent=1 // pred_check_branch
      %43 = sbr.rel (0) target = $region21
    $region20: #{feature_aggregator.1} parent=1 // pred_region
      %s45 = ssub.s32 2048, 2048
      %46 = vsyncadd [#allocation6], %s45
      %s47 = sshll.u32 [#allocation7], 4
      %s48 = int_to_ptr.vmem [resolvable:$true] %s47
      %53 = dma.hbm_to_vmem [thread:$0]  %s4, 2048, %s48, [#allocation6], 64, 64, 4
    $region21: #{feature_aggregator.1} parent=1 // pred_fallthru
      _
    // Predicated region
    $region22: #{feature_aggregator.1} parent=1 // pred_check
      _
    $region23: #{feature_aggregator.1} parent=1 // pred_check_branch
      %55 = sbr.rel (0) target = $region25
    $region24: #{feature_aggregator.1} parent=1 // pred_region
      _
    $region25: #{feature_aggregator.1} parent=1 // pred_fallthru
      _
    // Predicated region
    $region26: #{feature_aggregator.1} parent=1 // pred_check
      _
    $region27: #{feature_aggregator.1} parent=1 // pred_check_branch
      %57 = sbr.rel (0) target = $region29
    $region28: #{feature_aggregator.1} parent=1 // pred_region
      %58 = dma.done [#allocation3], 6144
    $region29: #{feature_aggregator.1} parent=1 // pred_fallthru
      _
    // Predicated region
    $region30: #{feature_aggregator.1} parent=1 // pred_check
      _
    $region31: #{feature_aggregator.1} parent=1 // pred_check_branch
      %60 = sbr.rel (0) target = $region33
    $region32: #{feature_aggregator.1} parent=1 // pred_region
      %61 = dma.done [#allocation6], 2048
    $region33: #{feature_aggregator.1} parent=1 // pred_fallthru
      _
    // Predicated region
    $region34: #{feature_aggregator.1} parent=1 // pred_check
      _
    $region35: #{feature_aggregator.1} parent=1 // pred_check_branch
      %63 = sbr.rel (0) target = $region37
    $region36: #{feature_aggregator.1} parent=1 // pred_region
      %64 = dma.done [#allocation6], 2048
    $region37: #{feature_aggregator.1} parent=1 // pred_fallthru
      _
    %v66 = vld [vmem:[%s5] sm:$0xf]
    %v67 = vld [vmem:[%s5 + $0x4] ss:$0 sm:$0xff]
    %v68 = vld [vmem:[%s5 + $0x5] ss:$0 sm:$0xff]
    %v69 = vld [vmem:[%s5 + $0x6] ss:$0 sm:$0xff]
    %v70 = vld [vmem:[%s5 + $0x7] ss:$0 sm:$0xff]
    %v71 = vld [vmem:[%s5 + $0x10] ss:$0 sm:$0xff]
    %v72 = vld [vmem:[%s5 + $0x11] ss:$0 sm:$0xff]
    %s73 = scalar_lea.vmem %s5, 18
    %v74 = vld [vmem:[%s73] ss:$8 sm:$0x3]
    %s75 = scalar_lea.vmem %s5, 19
    %v76 = vld [vmem:[%s75] ss:$8 sm:$0x3]
    %s77 = scalar_lea.vmem %s5, 20
    %v78 = vld [vmem:[%s77] ss:$8 sm:$0x3]
    %v79 = vld [vmem:[%s5 + $0x15] ss:$0 sm:$0xff]
    %v80 = vld [vmem:[%s0] sm:$0xff]
    %v81 = vld [vmem:[%s0 + $0x8] sm:$0xf]
    %v84 = vcombine.high %v80, %v80
    %v86 = vunpack.c.l.s4 1983009808
    %v87 = vunpack.c.0.s8 %v86
    %v88 = vlaneseq
    %v89 = vshrl.u32 %v88, 7
    %v90 = vsub.s32 %v87, %v89
    %v91 = vrot.slane %v80, %v90
    %v93 = vunpack.c.l.s4 1983009808
    %v94 = vunpack.c.0.s8 %v93
    %v95 = vlaneseq
    %v96 = vshrl.u32 %v95, 7
    %v97 = vsub.s32 %v94, %v96
    %v98 = vrot.slane %v84, %v97
    %v99 = vcombine.high %v91, %v91
    %v100 = vcombine.high %v98, %v98
    %v102 = vunpack.c.l.s4 1983009808
    %v103 = vunpack.c.0.s8 %v102
    %v104 = vlaneseq
    %v105 = vshrl.u32 %v104, 7
    %v106 = vsub.s32 %v103, %v105
    %v107 = vrot.slane %v81, %v106
    %v108 = vcombine.high %v107, %v107
    %v115 = vpack.c.bf16 %v91, %v91
    %v116 = vpack.c.bf16 %v99, %v99
    %v117 = vpack.c.bf16 %v98, %v98
    %v118 = vpack.c.bf16 %v100, %v100
    %v119 = vpack.c.bf16 %v107, %v107
    %v120 = vpack.c.bf16 %v108, %v108
    %v121 = vld [vmem:[#allocation2] sm:$0xf]
    %v122 = vld [vmem:[#allocation2 + $0x4] sm:$0xf]
    %v123 = vld [vmem:[#allocation2 + $0x8] sm:$0xf]
    %v124 = vld [vmem:[#allocation2 + $0xc] sm:$0xf]
    %v125 = vld [vmem:[#allocation2 + $0x10] sm:$0xf]
    %v126 = vld [vmem:[#allocation2 + $0x14] sm:$0xf]
    %v127 = vld [vmem:[#allocation2 + $0x18] sm:$0xf]
    %v128 = vld [vmem:[#allocation2 + $0x1c] sm:$0xf]
    %v129 = vld [vmem:[#allocation2 + $0x20] sm:$0xf]
    %v130 = vld [vmem:[#allocation2 + $0x24] sm:$0xf]
    %v131 = vld [vmem:[#allocation2 + $0x28] sm:$0xf]
    %v132 = vld [vmem:[#allocation2 + $0x2c] sm:$0xf]
    %v133 = vld [vmem:[#allocation2 + $0x30] sm:$0xf]
    %v134 = vld [vmem:[#allocation2 + $0x34] sm:$0xf]
    %v135 = vld [vmem:[#allocation2 + $0x38] sm:$0xf]
    %v136 = vld [vmem:[#allocation2 + $0x3c] sm:$0xf]
    %v137 = vld [vmem:[#allocation2 + $0x40] sm:$0xf]
    %v138 = vld [vmem:[#allocation2 + $0x44] sm:$0xf]
    %v139 = vld [vmem:[#allocation2 + $0x48] sm:$0xf]
    %v140 = vld [vmem:[#allocation2 + $0x4c] sm:$0xf]
    %v141 = vld [vmem:[#allocation2 + $0x50] sm:$0xf]
    %v142 = vld [vmem:[#allocation2 + $0x54] sm:$0xf]
    %v143 = vld [vmem:[#allocation2 + $0x58] sm:$0xf]
    %v144 = vld [vmem:[#allocation2 + $0x5c] sm:$0xf]
    %v145 = vld [vmem:[#allocation2 + $0x60] sm:$0xf]
    %v146 = vld [vmem:[#allocation2 + $0x64] sm:$0xf]
    %v147 = vld [vmem:[#allocation2 + $0x68] sm:$0xf]
    %v148 = vld [vmem:[#allocation2 + $0x6c] sm:$0xf]
    %v149 = vld [vmem:[#allocation2 + $0x70] sm:$0xf]
    %v150 = vld [vmem:[#allocation2 + $0x74] sm:$0xf]
    %v151 = vld [vmem:[#allocation2 + $0x78] sm:$0xf]
    %v152 = vld [vmem:[#allocation2 + $0x7c] sm:$0xf]
    %v153 = vld [vmem:[#allocation2 + $0x80] sm:$0xf]
    %v154 = vld [vmem:[#allocation2 + $0x84] sm:$0xf]
    %v155 = vld [vmem:[#allocation2 + $0x88] sm:$0xf]
    %v156 = vld [vmem:[#allocation2 + $0x8c] sm:$0xf]
    %v157 = vld [vmem:[#allocation2 + $0x90] sm:$0xf]
    %v158 = vld [vmem:[#allocation2 + $0x94] sm:$0xf]
    %v159 = vld [vmem:[#allocation2 + $0x98] sm:$0xf]
    %v160 = vld [vmem:[#allocation2 + $0x9c] sm:$0xf]
    %v161 = vld [vmem:[#allocation2 + $0xa0] sm:$0xf]
    %v162 = vld [vmem:[#allocation2 + $0xa4] sm:$0xf]
    %v163 = vld [vmem:[#allocation2 + $0xa8] sm:$0xf]
    %v164 = vld [vmem:[#allocation2 + $0xac] sm:$0xf]
    %v165 = vld [vmem:[#allocation2 + $0xb0] sm:$0xf]
    %v166 = vld [vmem:[#allocation2 + $0xb4] sm:$0xf]
    %v167 = vld [vmem:[#allocation2 + $0xb8] sm:$0xf]
    %v168 = vld [vmem:[#allocation2 + $0xbc] sm:$0xf]
    %v169 = vld [vmem:[#allocation2 + $0xc0] sm:$0xf]
    %v170 = vld [vmem:[#allocation2 + $0xc4] sm:$0xf]
    %v171 = vld [vmem:[#allocation2 + $0xc8] sm:$0xf]
    %v172 = vld [vmem:[#allocation2 + $0xcc] sm:$0xf]
    %v173 = vld [vmem:[#allocation2 + $0xd0] sm:$0xf]
    %v174 = vld [vmem:[#allocation2 + $0xd4] sm:$0xf]
    %v175 = vld [vmem:[#allocation2 + $0xd8] sm:$0xf]
    %v176 = vld [vmem:[#allocation2 + $0xdc] sm:$0xf]
    %v177 = vld [vmem:[#allocation2 + $0xe0] sm:$0xf]
    %v178 = vld [vmem:[#allocation2 + $0xe4] sm:$0xf]
    %v179 = vld [vmem:[#allocation2 + $0xe8] sm:$0xf]
    %v180 = vld [vmem:[#allocation2 + $0xec] sm:$0xf]
    %v181 = vld [vmem:[#allocation2 + $0xf0] sm:$0xf]
    %v182 = vld [vmem:[#allocation2 + $0xf4] sm:$0xf]
    %v183 = vld [vmem:[#allocation2 + $0xf8] sm:$0xf]
    %v184 = vld [vmem:[#allocation2 + $0xfc] sm:$0xf]
    %v185 = vld [vmem:[#allocation2 + $0x100] sm:$0xf]
    %v186 = vld [vmem:[#allocation2 + $0x104] sm:$0xf]
    %v187 = vld [vmem:[#allocation2 + $0x108] sm:$0xf]
    %v188 = vld [vmem:[#allocation2 + $0x10c] sm:$0xf]
    %v189 = vld [vmem:[#allocation2 + $0x110] sm:$0xf]
    %v190 = vld [vmem:[#allocation2 + $0x114] sm:$0xf]
    %v191 = vld [vmem:[#allocation2 + $0x118] sm:$0xf]
    %v192 = vld [vmem:[#allocation2 + $0x11c] sm:$0xf]
    %v193 = vld [vmem:[#allocation2 + $0x120] sm:$0xf]
    %v194 = vld [vmem:[#allocation2 + $0x124] sm:$0xf]
    %v195 = vld [vmem:[#allocation2 + $0x128] sm:$0xf]
    %v196 = vld [vmem:[#allocation2 + $0x12c] sm:$0xf]
    %v197 = vld [vmem:[#allocation2 + $0x130] sm:$0xf]
    %v198 = vld [vmem:[#allocation2 + $0x134] sm:$0xf]
    %v199 = vld [vmem:[#allocation2 + $0x138] sm:$0xf]
    %v200 = vld [vmem:[#allocation2 + $0x13c] sm:$0xf]
    %v201 = vld [vmem:[#allocation2 + $0x140] sm:$0xf]
    %v202 = vld [vmem:[#allocation2 + $0x144] sm:$0xf]
    %v203 = vld [vmem:[#allocation2 + $0x148] sm:$0xf]
    %v204 = vld [vmem:[#allocation2 + $0x14c] sm:$0xf]
    %v205 = vld [vmem:[#allocation2 + $0x150] sm:$0xf]
    %v206 = vld [vmem:[#allocation2 + $0x154] sm:$0xf]
    %v207 = vld [vmem:[#allocation2 + $0x158] sm:$0xf]
    %v208 = vld [vmem:[#allocation2 + $0x15c] sm:$0xf]
    %v209 = vld [vmem:[#allocation2 + $0x160] sm:$0xf]
    %v210 = vld [vmem:[#allocation2 + $0x164] sm:$0xf]
    %v211 = vld [vmem:[#allocation2 + $0x168] sm:$0xf]
    %v212 = vld [vmem:[#allocation2 + $0x16c] sm:$0xf]
    %v213 = vld [vmem:[#allocation2 + $0x170] sm:$0xf]
    %v214 = vld [vmem:[#allocation2 + $0x174] sm:$0xf]
    %v215 = vld [vmem:[#allocation2 + $0x178] sm:$0xf]
    %v216 = vld [vmem:[#allocation2 + $0x17c] sm:$0xf]
    %v313 = vunpack.c.l.b16 %v121
    %v314 = vunpack.c.l.b16 %v122
    %v315 = vunpack.c.l.b16 %v123
    %v316 = vunpack.c.l.b16 %v124
    %v317 = vunpack.c.l.b16 %v125
    %v318 = vunpack.c.l.b16 %v126
    %v319 = vunpack.c.l.b16 %v127
    %v320 = vunpack.c.l.b16 %v128
    %v321 = vunpack.c.l.b16 %v129
    %v322 = vunpack.c.l.b16 %v130
    %v323 = vunpack.c.l.b16 %v131
    %v324 = vunpack.c.l.b16 %v132
    %v325 = vunpack.c.l.b16 %v133
    %v326 = vunpack.c.l.b16 %v134
    %v327 = vunpack.c.l.b16 %v135
    %v328 = vunpack.c.l.b16 %v136
    %v329 = vunpack.c.l.b16 %v137
    %v330 = vunpack.c.l.b16 %v138
    %v331 = vunpack.c.l.b16 %v139
    %v332 = vunpack.c.l.b16 %v140
    %v333 = vunpack.c.l.b16 %v141
    %v334 = vunpack.c.l.b16 %v142
    %v335 = vunpack.c.l.b16 %v143
    %v336 = vunpack.c.l.b16 %v144
    %v337 = vunpack.c.l.b16 %v145
    %v338 = vunpack.c.l.b16 %v146
    %v339 = vunpack.c.l.b16 %v147
    %v340 = vunpack.c.l.b16 %v148
    %v341 = vunpack.c.l.b16 %v149
    %v342 = vunpack.c.l.b16 %v150
    %v343 = vunpack.c.l.b16 %v151
    %v344 = vunpack.c.l.b16 %v152
    %v345 = vunpack.c.l.b16 %v153
    %v346 = vunpack.c.l.b16 %v154
    %v347 = vunpack.c.l.b16 %v155
    %v348 = vunpack.c.l.b16 %v156
    %v349 = vunpack.c.l.b16 %v157
    %v350 = vunpack.c.l.b16 %v158
    %v351 = vunpack.c.l.b16 %v159
    %v352 = vunpack.c.l.b16 %v160
    %v353 = vunpack.c.l.b16 %v161
    %v354 = vunpack.c.l.b16 %v162
    %v355 = vunpack.c.l.b16 %v163
    %v356 = vunpack.c.l.b16 %v164
    %v357 = vunpack.c.l.b16 %v165
    %v358 = vunpack.c.l.b16 %v166
    %v359 = vunpack.c.l.b16 %v167
    %v360 = vunpack.c.l.b16 %v168
    %v361 = vunpack.c.l.b16 %v169
    %v362 = vunpack.c.l.b16 %v170
    %v363 = vunpack.c.l.b16 %v171
    %v364 = vunpack.c.l.b16 %v172
    %v365 = vunpack.c.l.b16 %v173
    %v366 = vunpack.c.l.b16 %v174
    %v367 = vunpack.c.l.b16 %v175
    %v368 = vunpack.c.l.b16 %v176
    %v369 = vunpack.c.l.b16 %v177
    %v370 = vunpack.c.l.b16 %v178
    %v371 = vunpack.c.l.b16 %v179
    %v372 = vunpack.c.l.b16 %v180
    %v373 = vunpack.c.l.b16 %v181
    %v374 = vunpack.c.l.b16 %v182
    %v375 = vunpack.c.l.b16 %v183
    %v376 = vunpack.c.l.b16 %v184
    %v377 = vunpack.c.l.b16 %v185
    %v378 = vunpack.c.l.b16 %v186
    %v379 = vunpack.c.l.b16 %v187
    %v380 = vunpack.c.l.b16 %v188
    %v381 = vunpack.c.l.b16 %v189
    %v382 = vunpack.c.l.b16 %v190
    %v383 = vunpack.c.l.b16 %v191
    %v384 = vunpack.c.l.b16 %v192
    %v385 = vunpack.c.l.b16 %v193
    %v386 = vunpack.c.l.b16 %v194
    %v387 = vunpack.c.l.b16 %v195
    %v388 = vunpack.c.l.b16 %v196
    %v389 = vunpack.c.l.b16 %v197
    %v390 = vunpack.c.l.b16 %v198
    %v391 = vunpack.c.l.b16 %v199
    %v392 = vunpack.c.l.b16 %v200
    %v393 = vunpack.c.l.b16 %v201
    %v394 = vunpack.c.l.b16 %v202
    %v395 = vunpack.c.l.b16 %v203
    %v396 = vunpack.c.l.b16 %v204
    %v397 = vunpack.c.l.b16 %v205
    %v398 = vunpack.c.l.b16 %v206
    %v399 = vunpack.c.l.b16 %v207
    %v400 = vunpack.c.l.b16 %v208
    %v401 = vunpack.c.l.b16 %v209
    %v402 = vunpack.c.l.b16 %v210
    %v403 = vunpack.c.l.b16 %v211
    %v404 = vunpack.c.l.b16 %v212
    %v405 = vunpack.c.l.b16 %v213
    %v406 = vunpack.c.l.b16 %v214
    %v407 = vunpack.c.l.b16 %v215
    %v408 = vunpack.c.l.b16 %v216
    %v409 = vpack.c.b16 %v314, %v313
    %v410 = vpack.c.b16 %v316, %v315
    %v411 = vpack.c.b16 %v318, %v317
    %v412 = vpack.c.b16 %v320, %v319
    %v413 = vpack.c.b16 %v322, %v321
    %v414 = vpack.c.b16 %v324, %v323
    %v415 = vpack.c.b16 %v326, %v325
    %v416 = vpack.c.b16 %v328, %v327
    %v417 = vpack.c.b16 %v330, %v329
    %v418 = vpack.c.b16 %v332, %v331
    %v419 = vpack.c.b16 %v334, %v333
    %v420 = vpack.c.b16 %v336, %v335
    %v421 = vpack.c.b16 %v338, %v337
    %v422 = vpack.c.b16 %v340, %v339
    %v423 = vpack.c.b16 %v342, %v341
    %v424 = vpack.c.b16 %v344, %v343
    %v425 = vpack.c.b16 %v346, %v345
    %v426 = vpack.c.b16 %v348, %v347
    %v427 = vpack.c.b16 %v350, %v349
    %v428 = vpack.c.b16 %v352, %v351
    %v429 = vpack.c.b16 %v354, %v353
    %v430 = vpack.c.b16 %v356, %v355
    %v431 = vpack.c.b16 %v358, %v357
    %v432 = vpack.c.b16 %v360, %v359
    %v433 = vpack.c.b16 %v362, %v361
    %v434 = vpack.c.b16 %v364, %v363
    %v435 = vpack.c.b16 %v366, %v365
    %v436 = vpack.c.b16 %v368, %v367
    %v437 = vpack.c.b16 %v370, %v369
    %v438 = vpack.c.b16 %v372, %v371
    %v439 = vpack.c.b16 %v374, %v373
    %v440 = vpack.c.b16 %v376, %v375
    %v441 = vpack.c.b16 %v378, %v377
    %v442 = vpack.c.b16 %v380, %v379
    %v443 = vpack.c.b16 %v382, %v381
    %v444 = vpack.c.b16 %v384, %v383
    %v445 = vpack.c.b16 %v386, %v385
    %v446 = vpack.c.b16 %v388, %v387
    %v447 = vpack.c.b16 %v390, %v389
    %v448 = vpack.c.b16 %v392, %v391
    %v449 = vpack.c.b16 %v394, %v393
    %v450 = vpack.c.b16 %v396, %v395
    %v451 = vpack.c.b16 %v398, %v397
    %v452 = vpack.c.b16 %v400, %v399
    %v453 = vpack.c.b16 %v402, %v401
    %v454 = vpack.c.b16 %v404, %v403
    %v455 = vpack.c.b16 %v406, %v405
    %v456 = vpack.c.b16 %v408, %v407
    %505 = vmatprep.subr.bf16.mxu0 0
    %506 = vmatpush1.bf16.msra.mxu0 %v416
    %507 = vmatprep.subr.bf16.mxu0 0
    %508 = vmatpush1.bf16.msra.mxu0 %v415
    %509 = vmatprep.subr.bf16.mxu0 0
    %510 = vmatpush1.bf16.msra.mxu0 %v414
    %511 = vmatprep.subr.bf16.mxu0 0
    %512 = vmatpush1.bf16.msra.mxu0 %v413
    %513 = vmatprep.subr.bf16.mxu0 0
    %514 = vmatpush1.bf16.msra.mxu0 %v412
    %515 = vmatprep.subr.bf16.mxu0 0
    %516 = vmatpush1.bf16.msra.mxu0 %v411
    %517 = vmatprep.subr.bf16.mxu0 0
    %518 = vmatpush1.bf16.msra.mxu0 %v410
    %519 = vmatprep.subr.bf16.mxu0 0
    %520 = vmatpush1.bf16.msra.mxu0 %v409
    %521 = vmatprep.subr.bf16.mxu0 0
    %522 = vmatpush2.bf16.msra.mxu0 %v424
    %523 = vmatprep.subr.bf16.mxu0 0
    %524 = vmatpush2.bf16.msra.mxu0 %v423
    %525 = vmatprep.subr.bf16.mxu0 0
    %526 = vmatpush2.bf16.msra.mxu0 %v422
    %527 = vmatprep.subr.bf16.mxu0 0
    %528 = vmatpush2.bf16.msra.mxu0 %v421
    %529 = vmatprep.subr.bf16.mxu0 0
    %530 = vmatpush2.bf16.msra.mxu0 %v420
    %531 = vmatprep.subr.bf16.mxu0 0
    %532 = vmatpush2.bf16.msra.mxu0 %v419
    %533 = vmatprep.subr.bf16.mxu0 0
    %534 = vmatpush2.bf16.msra.mxu0 %v418
    %535 = vmatprep.subr.bf16.mxu0 0
    %536 = vmatpush2.bf16.msra.mxu0 %v417
    %537 = vmatprep.mubr.bf16.mxu0 %v116
    %538 = vmatmul.mubr.bf16.gmra.mxu0 %v115
    %v539 = vpop.f32.mrf.mxu0
    %v540 = vadd.f32 %v67, %v539
    %v541 = vpop.f32.mrf.mxu0
    %v542 = vpop.f32.mrf.mxu0
    %v543 = vpop.f32.mrf.mxu0
    %544 = vdwg.mxu0
    %545 = vmatprep.subr.bf16.mxu0 0
    %546 = vmatpush1.bf16.msra.mxu0 %v432
    %547 = vmatprep.subr.bf16.mxu0 0
    %548 = vmatpush1.bf16.msra.mxu0 %v431
    %549 = vmatprep.subr.bf16.mxu0 0
    %550 = vmatpush1.bf16.msra.mxu0 %v430
    %551 = vmatprep.subr.bf16.mxu0 0
    %552 = vmatpush1.bf16.msra.mxu0 %v429
    %553 = vmatprep.subr.bf16.mxu0 0
    %554 = vmatpush1.bf16.msra.mxu0 %v428
    %555 = vmatprep.subr.bf16.mxu0 0
    %556 = vmatpush1.bf16.msra.mxu0 %v427
    %557 = vmatprep.subr.bf16.mxu0 0
    %558 = vmatpush1.bf16.msra.mxu0 %v426
    %559 = vmatprep.subr.bf16.mxu0 0
    %560 = vmatpush1.bf16.msra.mxu0 %v425
    %561 = vmatprep.subr.bf16.mxu0 0
    %562 = vmatpush2.bf16.msra.mxu0 %v440
    %563 = vmatprep.subr.bf16.mxu0 0
    %564 = vmatpush2.bf16.msra.mxu0 %v439
    %565 = vmatprep.subr.bf16.mxu0 0
    %566 = vmatpush2.bf16.msra.mxu0 %v438
    %567 = vmatprep.subr.bf16.mxu0 0
    %568 = vmatpush2.bf16.msra.mxu0 %v437
    %569 = vmatprep.subr.bf16.mxu0 0
    %570 = vmatpush2.bf16.msra.mxu0 %v436
    %571 = vmatprep.subr.bf16.mxu0 0
    %572 = vmatpush2.bf16.msra.mxu0 %v435
    %573 = vmatprep.subr.bf16.mxu0 0
    %574 = vmatpush2.bf16.msra.mxu0 %v434
    %575 = vmatprep.subr.bf16.mxu0 0
    %576 = vmatpush2.bf16.msra.mxu0 %v433
    %577 = vmatprep.mubr.bf16.mxu0 %v118
    %578 = vmatmul.mubr.bf16.gmra.mxu0 %v117
    %v579 = vpop.f32.mrf.mxu0
    %v580 = vadd.f32 %v540, %v579
    %v581 = vpop.f32.mrf.mxu0
    %v582 = vpop.f32.mrf.mxu0
    %v583 = vpop.f32.mrf.mxu0
    %584 = vdwg.mxu0
    %585 = vmatprep.subr.bf16.mxu0 0
    %586 = vmatpush1.bf16.msra.mxu0 %v448
    %587 = vmatprep.subr.bf16.mxu0 0
    %588 = vmatpush1.bf16.msra.mxu0 %v447
    %589 = vmatprep.subr.bf16.mxu0 0
    %590 = vmatpush1.bf16.msra.mxu0 %v446
    %591 = vmatprep.subr.bf16.mxu0 0
    %592 = vmatpush1.bf16.msra.mxu0 %v445
    %593 = vmatprep.subr.bf16.mxu0 0
    %594 = vmatpush1.bf16.msra.mxu0 %v444
    %595 = vmatprep.subr.bf16.mxu0 0
    %596 = vmatpush1.bf16.msra.mxu0 %v443
    %597 = vmatprep.subr.bf16.mxu0 0
    %598 = vmatpush1.bf16.msra.mxu0 %v442
    %599 = vmatprep.subr.bf16.mxu0 0
    %600 = vmatpush1.bf16.msra.mxu0 %v441
    %601 = vmatprep.subr.bf16.mxu0 0
    %602 = vmatpush2.bf16.msra.mxu0 %v456
    %603 = vmatprep.subr.bf16.mxu0 0
    %604 = vmatpush2.bf16.msra.mxu0 %v455
    %605 = vmatprep.subr.bf16.mxu0 0
    %606 = vmatpush2.bf16.msra.mxu0 %v454
    %607 = vmatprep.subr.bf16.mxu0 0
    %608 = vmatpush2.bf16.msra.mxu0 %v453
    %609 = vmatprep.subr.bf16.mxu0 0
    %610 = vmatpush2.bf16.msra.mxu0 %v452
    %611 = vmatprep.subr.bf16.mxu0 0
    %612 = vmatpush2.bf16.msra.mxu0 %v451
    %613 = vmatprep.subr.bf16.mxu0 0
    %614 = vmatpush2.bf16.msra.mxu0 %v450
    %615 = vmatprep.subr.bf16.mxu0 0
    %616 = vmatpush2.bf16.msra.mxu0 %v449
    %617 = vmatprep.mubr.bf16.mxu0 %v120
    %618 = vmatmul.mubr.bf16.gmra.mxu0 %v119
    %v619 = vpop.f32.mrf.mxu0
    %v620 = vadd.f32 %v580, %v619
    %v621 = vpop.f32.mrf.mxu0
    %v622 = vpop.f32.mrf.mxu0
    %v623 = vpop.f32.mrf.mxu0
    %624 = vdwg.mxu0
    %vm625 = vcmask 1041408
    %v626 = vsel %vm625, %v620, 0.0
    %v627 = vrot.slane %v626, 4
    %v628 = vadd.f32 %v626, %v627
    %v629 = vrot.slane %v628, 2
    %v630 = vadd.f32 %v628, %v629
    %v631 = vrot.slane %v630, 1
    %v632 = vadd.f32 %v630, %v631
    %v633 = vrcp.pop 2.0
    %v634 = vmul.f32 %v632, %v633
    %v635 = vmul.f32 %v620, %v620
    %v636 = vsel %vm625, %v635, 0.0
    %v637 = vrot.slane %v636, 4
    %v638 = vadd.f32 %v636, %v637
    %v639 = vrot.slane %v638, 2
    %v640 = vadd.f32 %v638, %v639
    %v641 = vrot.slane %v640, 1
    %v642 = vadd.f32 %v640, %v641
    %v643 = vmul.f32 %v642, %v633
    %v644 = vmul.f32 %v634, %v634
    %v645 = vsub.f32 %v643, %v644
    %v646 = vmax.f32 %v645, 0.0
    %v647 = vsub.f32 %v620, %v634
    %v648 = vadd.f32 %v646, 1e-05
    %v649 = vrsqrt.pop %v648
    %v650 = vmul.f32 %v647, %v649
    %v651 = vmul.f32 %v650, %v68
    %v652 = vadd.f32 %v651, %v69
    %vm653 = vcmp.ge.f32.partialorder %v652, 0.0
    %v654 = vmul.f32 %v652, 0.01
    %v655 = vsel %vm653, %v652, %v654
    %v656 = vld [vmem:[%s1] sm:$0x3]
    %vm657 = vcmask 31744
    %v659 = vsel %vm657, %v656, 0
    %vm661 = vcmask 1043456
    %v663 = vsel %vm661, %v66, 0
    %665 = vmatprep.subr.mxu0 0.0
    %666 = vmatpush1.msra.mxu0 0.0
    %667 = vmatprep.subr.mxu0 0.0
    %668 = vmatpush1.msra.mxu0 0.0
    %669 = vmatprep.subr.mxu0 0.0
    %670 = vmatpush1.msra.mxu0 0.0
    %671 = vmatprep.subr.mxu0 0.0
    %672 = vmatpush1.msra.mxu0 0.0
    %673 = vmatprep.subr.mxu0 0.0
    %674 = vmatpush1.msra.mxu0 0.0
    %675 = vmatprep.subr.mxu0 0.0
    %676 = vmatpush1.msra.mxu0 0.0
    %677 = vmatprep.subr.mxu0 0.0
    %678 = vmatpush1.msra.mxu0 0.0
    %679 = vmatprep.subr.mxu0 0.0
    %680 = vmatpush1.msra.mxu0 0.0
    %681 = vmatprep.subr.mxu0 0.0
    %682 = vmatpush1.msra.mxu0 0.0
    %683 = vmatprep.subr.mxu0 0.0
    %684 = vmatpush1.msra.mxu0 0.0
    %685 = vmatprep.subr.mxu0 0.0
    %686 = vmatpush1.msra.mxu0 0.0
    %687 = vmatprep.subr.mxu0 0.0
    %688 = vmatpush1.msra.mxu0 0.0
    %689 = vmatprep.subr.mxu0 0.0
    %690 = vmatpush1.msra.mxu0 0.0
    %691 = vmatprep.subr.mxu0 0.0
    %692 = vmatpush1.msra.mxu0 0.0
    %693 = vmatprep.subr.mxu0 0.0
    %694 = vmatpush1.msra.mxu0 0.0
    %695 = vmatprep.subr.mxu0 0.0
    %696 = vmatpush1.msra.mxu0 %v663
    %697 = vmatprep.subr.mxu0 0.0
    %698 = vmatpush2.msra.mxu0 0.0
    %699 = vmatprep.subr.mxu0 0.0
    %700 = vmatpush2.msra.mxu0 0.0
    %701 = vmatprep.subr.mxu0 0.0
    %702 = vmatpush2.msra.mxu0 0.0
    %703 = vmatprep.subr.mxu0 0.0
    %704 = vmatpush2.msra.mxu0 0.0
    %705 = vmatprep.subr.mxu0 0.0
    %706 = vmatpush2.msra.mxu0 0.0
    %707 = vmatprep.subr.mxu0 0.0
    %708 = vmatpush2.msra.mxu0 0.0
    %709 = vmatprep.subr.mxu0 0.0
    %710 = vmatpush2.msra.mxu0 0.0
    %711 = vmatprep.subr.mxu0 0.0
    %712 = vmatpush2.msra.mxu0 0.0
    %713 = vmatprep.subr.mxu0 0.0
    %714 = vmatpush2.msra.mxu0 0.0
    %715 = vmatprep.subr.mxu0 0.0
    %716 = vmatpush2.msra.mxu0 0.0
    %717 = vmatprep.subr.mxu0 0.0
    %718 = vmatpush2.msra.mxu0 0.0
    %719 = vmatprep.subr.mxu0 0.0
    %720 = vmatpush2.msra.mxu0 0.0
    %721 = vmatprep.subr.mxu0 0.0
    %722 = vmatpush2.msra.mxu0 0.0
    %723 = vmatprep.subr.mxu0 0.0
    %724 = vmatpush2.msra.mxu0 0.0
    %725 = vmatprep.subr.mxu0 0.0
    %726 = vmatpush2.msra.mxu0 0.0
    %727 = vmatprep.subr.mxu0 0.0
    %728 = vmatpush2.msra.mxu0 0.0
    %729 = vmatprep.mubr.f32.mxu0 0.0
    %730 = vmatmul.mubr.f32.gmra.mxu0 %v659
    %v731 = vpop.f32.mrf.mxu0
    %v732 = vadd.f32 %v70, %v731
    %v733 = vpop.f32.mrf.mxu0
    %734 = vdwg.mxu0
    %v735 = vsel %vm625, %v732, 0.0
    %v736 = vrot.slane %v735, 4
    %v737 = vadd.f32 %v735, %v736
    %v738 = vrot.slane %v737, 2
    %v739 = vadd.f32 %v737, %v738
    %v740 = vrot.slane %v739, 1
    %v741 = vadd.f32 %v739, %v740
    %v742 = vmul.f32 %v741, %v633
    %v743 = vmul.f32 %v732, %v732
    %v744 = vsel %vm625, %v743, 0.0
    %v745 = vrot.slane %v744, 4
    %v746 = vadd.f32 %v744, %v745
    %v747 = vrot.slane %v746, 2
    %v748 = vadd.f32 %v746, %v747
    %v749 = vrot.slane %v748, 1
    %v750 = vadd.f32 %v748, %v749
    %v751 = vmul.f32 %v750, %v633
    %v752 = vmul.f32 %v742, %v742
    %v753 = vsub.f32 %v751, %v752
    %v754 = vmax.f32 %v753, 0.0
    %v755 = vsub.f32 %v732, %v742
    %v756 = vadd.f32 %v754, 1e-05
    %v757 = vrsqrt.pop %v756
    %v758 = vmul.f32 %v755, %v757
    %v759 = vmul.f32 %v758, %v71
    %v760 = vadd.f32 %v759, %v72
    %vm761 = vcmp.ge.f32.partialorder %v760, 0.0
    %v762 = vmul.f32 %v760, 0.01
    %v763 = vsel %vm761, %v760, %v762
    %v764 = vadd.f32 %v655, %v763
    %v765 = vpack.c.bf16 %v764, %v764
    %v766 = vld [vmem:[#allocation5] sm:$0xff]
    %v767 = vld [vmem:[#allocation5 + $0x8] sm:$0xff]
    %v768 = vld [vmem:[#allocation5 + $0x10] sm:$0xff]
    %v769 = vld [vmem:[#allocation5 + $0x18] sm:$0xff]
    %v770 = vld [vmem:[#allocation5 + $0x20] sm:$0xff]
    %v771 = vld [vmem:[#allocation5 + $0x28] sm:$0xff]
    %v772 = vld [vmem:[#allocation5 + $0x30] sm:$0xff]
    %v773 = vld [vmem:[#allocation5 + $0x38] sm:$0xff]
    %v774 = vld [vmem:[#allocation5 + $0x40] sm:$0xff]
    %v775 = vld [vmem:[#allocation5 + $0x48] sm:$0xff]
    %v776 = vld [vmem:[#allocation5 + $0x50] sm:$0xff]
    %v777 = vld [vmem:[#allocation5 + $0x58] sm:$0xff]
    %v778 = vld [vmem:[#allocation5 + $0x60] sm:$0xff]
    %v779 = vld [vmem:[#allocation5 + $0x68] sm:$0xff]
    %v780 = vld [vmem:[#allocation5 + $0x70] sm:$0xff]
    %v781 = vld [vmem:[#allocation5 + $0x78] sm:$0xff]
    %v783 = vlaneseq
    %v784 = vshrl.u32 %v783, 7
    %v785 = vsub.s32 0, %v784
    %v786 = vrot.slane %v74, %v785
    %v787 = vlaneseq
    %v788 = vshrl.u32 %v787, 7
    %v789 = vsub.s32 1, %v788
    %v790 = vrot.slane %v74, %v789
    %v809 = vunpack.c.l.b16 %v766
    %v810 = vunpack.c.h.b16 %v766
    %v811 = vunpack.c.l.b16 %v767
    %v812 = vunpack.c.h.b16 %v767
    %v813 = vunpack.c.l.b16 %v768
    %v814 = vunpack.c.h.b16 %v768
    %v815 = vunpack.c.l.b16 %v769
    %v816 = vunpack.c.h.b16 %v769
    %v817 = vunpack.c.l.b16 %v770
    %v818 = vunpack.c.h.b16 %v770
    %v819 = vunpack.c.l.b16 %v771
    %v820 = vunpack.c.h.b16 %v771
    %v821 = vunpack.c.l.b16 %v772
    %v822 = vunpack.c.h.b16 %v772
    %v823 = vunpack.c.l.b16 %v773
    %v824 = vunpack.c.h.b16 %v773
    %v825 = vunpack.c.l.b16 %v774
    %v826 = vunpack.c.h.b16 %v774
    %v827 = vunpack.c.l.b16 %v775
    %v828 = vunpack.c.h.b16 %v775
    %v829 = vunpack.c.l.b16 %v776
    %v830 = vunpack.c.h.b16 %v776
    %v831 = vunpack.c.l.b16 %v777
    %v832 = vunpack.c.h.b16 %v777
    %v833 = vunpack.c.l.b16 %v778
    %v834 = vunpack.c.h.b16 %v778
    %v835 = vunpack.c.l.b16 %v779
    %v836 = vunpack.c.h.b16 %v779
    %v837 = vunpack.c.l.b16 %v780
    %v838 = vunpack.c.h.b16 %v780
    %v839 = vunpack.c.l.b16 %v781
    %v840 = vunpack.c.h.b16 %v781
    %v841 = vpack.c.b16 %v811, %v809
    %v842 = vpack.c.b16 %v812, %v810
    %v843 = vpack.c.b16 %v815, %v813
    %v844 = vpack.c.b16 %v816, %v814
    %v845 = vpack.c.b16 %v819, %v817
    %v846 = vpack.c.b16 %v820, %v818
    %v847 = vpack.c.b16 %v823, %v821
    %v848 = vpack.c.b16 %v824, %v822
    %v849 = vpack.c.b16 %v827, %v825
    %v850 = vpack.c.b16 %v828, %v826
    %v851 = vpack.c.b16 %v831, %v829
    %v852 = vpack.c.b16 %v832, %v830
    %v853 = vpack.c.b16 %v835, %v833
    %v854 = vpack.c.b16 %v836, %v834
    %v855 = vpack.c.b16 %v839, %v837
    %v856 = vpack.c.b16 %v840, %v838
    %873 = vmatprep.subr.bf16.mxu0 %v856
    %874 = vmatpush1.bf16.msra.mxu0 %v855
    %875 = vmatprep.subr.bf16.mxu0 %v854
    %876 = vmatpush1.bf16.msra.mxu0 %v853
    %877 = vmatprep.subr.bf16.mxu0 %v852
    %878 = vmatpush1.bf16.msra.mxu0 %v851
    %879 = vmatprep.subr.bf16.mxu0 %v850
    %880 = vmatpush1.bf16.msra.mxu0 %v849
    %881 = vmatprep.subr.bf16.mxu0 %v848
    %882 = vmatpush1.bf16.msra.mxu0 %v847
    %883 = vmatprep.subr.bf16.mxu0 %v846
    %884 = vmatpush1.bf16.msra.mxu0 %v845
    %885 = vmatprep.subr.bf16.mxu0 %v844
    %886 = vmatpush1.bf16.msra.mxu0 %v843
    %887 = vmatprep.subr.bf16.mxu0 %v842
    %888 = vmatpush1.bf16.msra.mxu0 %v841
    %889 = vmatprep.subr.bf16.mxu0 0
    %890 = vmatpush2.bf16.msra.mxu0 0
    %891 = vmatprep.subr.bf16.mxu0 0
    %892 = vmatpush2.bf16.msra.mxu0 0
    %893 = vmatprep.subr.bf16.mxu0 0
    %894 = vmatpush2.bf16.msra.mxu0 0
    %895 = vmatprep.subr.bf16.mxu0 0
    %896 = vmatpush2.bf16.msra.mxu0 0
    %897 = vmatprep.subr.bf16.mxu0 0
    %898 = vmatpush2.bf16.msra.mxu0 0
    %899 = vmatprep.subr.bf16.mxu0 0
    %900 = vmatpush2.bf16.msra.mxu0 0
    %901 = vmatprep.subr.bf16.mxu0 0
    %902 = vmatpush2.bf16.msra.mxu0 0
    %903 = vmatprep.subr.bf16.mxu0 0
    %904 = vmatpush2.bf16.msra.mxu0 0
    %905 = vmatprep.mubr.bf16.mxu0 0
    %906 = vmatmul.mubr.bf16.gmra.mxu0 %v765
    %v907 = vpop.f32.mrf.mxu0
    %v908 = vadd.f32 %v786, %v907
    %v909 = vpop.f32.mrf.mxu0
    %v910 = vadd.f32 %v790, %v909
    %v911 = vpop.f32.mrf.mxu0
    %v912 = vpop.f32.mrf.mxu0
    %913 = vdwg.mxu0
    %v914 = vsel %vm625, %v908, 0.0
    %v915 = vrot.slane %v914, 4
    %v916 = vadd.f32 %v914, %v915
    %v917 = vrot.slane %v916, 2
    %v918 = vadd.f32 %v916, %v917
    %v919 = vrot.slane %v918, 1
    %v920 = vadd.f32 %v918, %v919
    %v921 = vsel %vm625, %v910, 0.0
    %v922 = vrot.slane %v921, 4
    %v923 = vadd.f32 %v921, %v922
    %v924 = vrot.slane %v923, 2
    %v925 = vadd.f32 %v923, %v924
    %v926 = vrot.slane %v925, 1
    %v927 = vadd.f32 %v925, %v926
    %v928 = vmul.f32 %v920, %v633
    %v929 = vmul.f32 %v927, %v633
    %v930 = vmul.f32 %v908, %v908
    %v931 = vmul.f32 %v910, %v910
    %v932 = vsel %vm625, %v930, 0.0
    %v933 = vrot.slane %v932, 4
    %v934 = vadd.f32 %v932, %v933
    %v935 = vrot.slane %v934, 2
    %v936 = vadd.f32 %v934, %v935
    %v937 = vrot.slane %v936, 1
    %v938 = vadd.f32 %v936, %v937
    %v939 = vsel %vm625, %v931, 0.0
    %v940 = vrot.slane %v939, 4
    %v941 = vadd.f32 %v939, %v940
    %v942 = vrot.slane %v941, 2
    %v943 = vadd.f32 %v941, %v942
    %v944 = vrot.slane %v943, 1
    %v945 = vadd.f32 %v943, %v944
    %v946 = vmul.f32 %v938, %v633
    %v947 = vmul.f32 %v945, %v633
    %v948 = vmul.f32 %v928, %v928
    %v949 = vmul.f32 %v929, %v929
    %v950 = vsub.f32 %v946, %v948
    %v951 = vsub.f32 %v947, %v949
    %v952 = vmax.f32 %v950, 0.0
    %v953 = vmax.f32 %v951, 0.0
    %v954 = vsub.f32 %v908, %v928
    %v955 = vsub.f32 %v910, %v929
    %v956 = vadd.f32 %v952, 1e-05
    %v957 = vadd.f32 %v953, 1e-05
    %v958 = vrsqrt.pop %v956
    %v959 = vrsqrt.pop %v957
    %v960 = vmul.f32 %v954, %v958
    %v961 = vmul.f32 %v955, %v959
    %v963 = vlaneseq
    %v964 = vshrl.u32 %v963, 7
    %v965 = vsub.s32 0, %v964
    %v966 = vrot.slane %v76, %v965
    %v967 = vlaneseq
    %v968 = vshrl.u32 %v967, 7
    %v969 = vsub.s32 1, %v968
    %v970 = vrot.slane %v76, %v969
    %v973 = vmul.f32 %v960, %v966
    %v974 = vmul.f32 %v961, %v970
    %v976 = vlaneseq
    %v977 = vshrl.u32 %v976, 7
    %v978 = vsub.s32 0, %v977
    %v979 = vrot.slane %v78, %v978
    %v980 = vlaneseq
    %v981 = vshrl.u32 %v980, 7
    %v982 = vsub.s32 1, %v981
    %v983 = vrot.slane %v78, %v982
    %v986 = vadd.f32 %v973, %v979
    %v987 = vadd.f32 %v974, %v983
    %vm988 = vcmp.ge.f32.partialorder %v986, 0.0
    %vm989 = vcmp.ge.f32.partialorder %v987, 0.0
    %v990 = vmul.f32 %v986, 0.01
    %v991 = vmul.f32 %v987, 0.01
    %v992 = vsel %vm988, %v986, %v990
    %v993 = vsel %vm989, %v987, %v991
    %v994 = vpack.c.bf16 %v992, %v992
    %v995 = vpack.c.bf16 %v993, %v993
    %v996 = vld [vmem:[#allocation7] sm:$0xf]
    %v997 = vld [vmem:[#allocation7 + $0x4] sm:$0xf]
    %v998 = vld [vmem:[#allocation7 + $0x8] sm:$0xf]
    %v999 = vld [vmem:[#allocation7 + $0xc] sm:$0xf]
    %v1000 = vld [vmem:[#allocation7 + $0x10] sm:$0xf]
    %v1001 = vld [vmem:[#allocation7 + $0x14] sm:$0xf]
    %v1002 = vld [vmem:[#allocation7 + $0x18] sm:$0xf]
    %v1003 = vld [vmem:[#allocation7 + $0x1c] sm:$0xf]
    %v1004 = vld [vmem:[#allocation7 + $0x20] sm:$0xf]
    %v1005 = vld [vmem:[#allocation7 + $0x24] sm:$0xf]
    %v1006 = vld [vmem:[#allocation7 + $0x28] sm:$0xf]
    %v1007 = vld [vmem:[#allocation7 + $0x2c] sm:$0xf]
    %v1008 = vld [vmem:[#allocation7 + $0x30] sm:$0xf]
    %v1009 = vld [vmem:[#allocation7 + $0x34] sm:$0xf]
    %v1010 = vld [vmem:[#allocation7 + $0x38] sm:$0xf]
    %v1011 = vld [vmem:[#allocation7 + $0x3c] sm:$0xf]
    %v1012 = vld [vmem:[#allocation7 + $0x40] sm:$0xf]
    %v1013 = vld [vmem:[#allocation7 + $0x44] sm:$0xf]
    %v1014 = vld [vmem:[#allocation7 + $0x48] sm:$0xf]
    %v1015 = vld [vmem:[#allocation7 + $0x4c] sm:$0xf]
    %v1016 = vld [vmem:[#allocation7 + $0x50] sm:$0xf]
    %v1017 = vld [vmem:[#allocation7 + $0x54] sm:$0xf]
    %v1018 = vld [vmem:[#allocation7 + $0x58] sm:$0xf]
    %v1019 = vld [vmem:[#allocation7 + $0x5c] sm:$0xf]
    %v1020 = vld [vmem:[#allocation7 + $0x60] sm:$0xf]
    %v1021 = vld [vmem:[#allocation7 + $0x64] sm:$0xf]
    %v1022 = vld [vmem:[#allocation7 + $0x68] sm:$0xf]
    %v1023 = vld [vmem:[#allocation7 + $0x6c] sm:$0xf]
    %v1024 = vld [vmem:[#allocation7 + $0x70] sm:$0xf]
    %v1025 = vld [vmem:[#allocation7 + $0x74] sm:$0xf]
    %v1026 = vld [vmem:[#allocation7 + $0x78] sm:$0xf]
    %v1027 = vld [vmem:[#allocation7 + $0x7c] sm:$0xf]
    %v1060 = vunpack.c.l.b16 %v996
    %v1061 = vunpack.c.l.b16 %v997
    %v1062 = vunpack.c.l.b16 %v998
    %v1063 = vunpack.c.l.b16 %v999
    %v1064 = vunpack.c.l.b16 %v1000
    %v1065 = vunpack.c.l.b16 %v1001
    %v1066 = vunpack.c.l.b16 %v1002
    %v1067 = vunpack.c.l.b16 %v1003
    %v1068 = vunpack.c.l.b16 %v1004
    %v1069 = vunpack.c.l.b16 %v1005
    %v1070 = vunpack.c.l.b16 %v1006
    %v1071 = vunpack.c.l.b16 %v1007
    %v1072 = vunpack.c.l.b16 %v1008
    %v1073 = vunpack.c.l.b16 %v1009
    %v1074 = vunpack.c.l.b16 %v1010
    %v1075 = vunpack.c.l.b16 %v1011
    %v1076 = vunpack.c.l.b16 %v1012
    %v1077 = vunpack.c.l.b16 %v1013
    %v1078 = vunpack.c.l.b16 %v1014
    %v1079 = vunpack.c.l.b16 %v1015
    %v1080 = vunpack.c.l.b16 %v1016
    %v1081 = vunpack.c.l.b16 %v1017
    %v1082 = vunpack.c.l.b16 %v1018
    %v1083 = vunpack.c.l.b16 %v1019
    %v1084 = vunpack.c.l.b16 %v1020
    %v1085 = vunpack.c.l.b16 %v1021
    %v1086 = vunpack.c.l.b16 %v1022
    %v1087 = vunpack.c.l.b16 %v1023
    %v1088 = vunpack.c.l.b16 %v1024
    %v1089 = vunpack.c.l.b16 %v1025
    %v1090 = vunpack.c.l.b16 %v1026
    %v1091 = vunpack.c.l.b16 %v1027
    %v1092 = vpack.c.b16 %v1061, %v1060
    %v1093 = vpack.c.b16 %v1063, %v1062
    %v1094 = vpack.c.b16 %v1065, %v1064
    %v1095 = vpack.c.b16 %v1067, %v1066
    %v1096 = vpack.c.b16 %v1069, %v1068
    %v1097 = vpack.c.b16 %v1071, %v1070
    %v1098 = vpack.c.b16 %v1073, %v1072
    %v1099 = vpack.c.b16 %v1075, %v1074
    %v1100 = vpack.c.b16 %v1077, %v1076
    %v1101 = vpack.c.b16 %v1079, %v1078
    %v1102 = vpack.c.b16 %v1081, %v1080
    %v1103 = vpack.c.b16 %v1083, %v1082
    %v1104 = vpack.c.b16 %v1085, %v1084
    %v1105 = vpack.c.b16 %v1087, %v1086
    %v1106 = vpack.c.b16 %v1089, %v1088
    %v1107 = vpack.c.b16 %v1091, %v1090
    %1124 = vmatprep.subr.bf16.mxu0 0
    %1125 = vmatpush1.bf16.msra.mxu0 %v1099
    %1126 = vmatprep.subr.bf16.mxu0 0
    %1127 = vmatpush1.bf16.msra.mxu0 %v1098
    %1128 = vmatprep.subr.bf16.mxu0 0
    %1129 = vmatpush1.bf16.msra.mxu0 %v1097
    %1130 = vmatprep.subr.bf16.mxu0 0
    %1131 = vmatpush1.bf16.msra.mxu0 %v1096
    %1132 = vmatprep.subr.bf16.mxu0 0
    %1133 = vmatpush1.bf16.msra.mxu0 %v1095
    %1134 = vmatprep.subr.bf16.mxu0 0
    %1135 = vmatpush1.bf16.msra.mxu0 %v1094
    %1136 = vmatprep.subr.bf16.mxu0 0
    %1137 = vmatpush1.bf16.msra.mxu0 %v1093
    %1138 = vmatprep.subr.bf16.mxu0 0
    %1139 = vmatpush1.bf16.msra.mxu0 %v1092
    %1140 = vmatprep.subr.bf16.mxu0 0
    %1141 = vmatpush2.bf16.msra.mxu0 %v1107
    %1142 = vmatprep.subr.bf16.mxu0 0
    %1143 = vmatpush2.bf16.msra.mxu0 %v1106
    %1144 = vmatprep.subr.bf16.mxu0 0
    %1145 = vmatpush2.bf16.msra.mxu0 %v1105
    %1146 = vmatprep.subr.bf16.mxu0 0
    %1147 = vmatpush2.bf16.msra.mxu0 %v1104
    %1148 = vmatprep.subr.bf16.mxu0 0
    %1149 = vmatpush2.bf16.msra.mxu0 %v1103
    %1150 = vmatprep.subr.bf16.mxu0 0
    %1151 = vmatpush2.bf16.msra.mxu0 %v1102
    %1152 = vmatprep.subr.bf16.mxu0 0
    %1153 = vmatpush2.bf16.msra.mxu0 %v1101
    %1154 = vmatprep.subr.bf16.mxu0 0
    %1155 = vmatpush2.bf16.msra.mxu0 %v1100
    %1156 = vmatprep.mubr.bf16.mxu0 %v995
    %1157 = vmatmul.mubr.bf16.gmra.mxu0 %v994
    %v1158 = vpop.f32.mrf.mxu0
    %v1159 = vadd.f32 %v79, %v1158
    %v1160 = vpop.f32.mrf.mxu0
    %v1161 = vpop.f32.mrf.mxu0
    %v1162 = vpop.f32.mrf.mxu0
    %1163 = vdwg.mxu0
    %1164 = vst [vmem:[#allocation8] sm:$0x3] %v1159
    // Predicated region
    $region38: #{feature_aggregator.1} parent=1 // pred_check
      _
    $region39: #{feature_aggregator.1} parent=1 // pred_check_branch
      %1166 = sbr.rel (0) target = $region41
    $region40: #{feature_aggregator.1} parent=1 // pred_region
      %s1168 = ssub.s32 32, 32
      %1169 = vsyncadd [#allocation4], %s1168
      %s1171 = sshll.u32 [#allocation8], 4
      %s1172 = int_to_ptr.vmem [resolvable:$true] %s1171
      %1174 = dma.vmem_to_hbm [thread:$0]  %s1172, 32, %s6, [#allocation4]
    $region41: #{feature_aggregator.1} parent=1 // pred_fallthru
      _
    // Predicated region
    $region42: #{feature_aggregator.1} parent=1 // pred_check
      _
    $region43: #{feature_aggregator.1} parent=1 // pred_check_branch
      %1176 = sbr.rel (0) target = $region45
    $region44: #{feature_aggregator.1} parent=1 // pred_region
      %1177 = dma.done [#allocation4], 32
    $region45: #{feature_aggregator.1} parent=1 // pred_fallthru
      _
    %1178 = vsyncpa [#allocation3], 1
    %1179 = vsyncpa [#allocation6], 1
    %1180 = vsyncpa [#allocation4], 1

</llo_original>
